<compile_context>
chip_gen: v7x
topology: tpu7x:2x2x1
jax: 0.10.0
libtpu: 0.0.40
codegen_flags: <defaults>
</compile_context>

<pallas_src>
import jax
import jax.numpy as jnp
import numpy as np
from jax.experimental import pallas as pl
from jax.experimental.pallas import tpu as pltpu


_MiB = 1024 * 1024


# ---------------------------------------------------------------------------
# Small helpers
# ---------------------------------------------------------------------------

def _round_up(x, m):
    return -(-x // m) * m


def _vmem_limit_bytes():
    """Generation-aware scoped-VMEM limit (96 MiB on 128 MiB parts, cap/2 on v7x)."""
    try:
        cap = int(pltpu.get_tpu_info().vmem_capacity_bytes)
    except Exception:
        cap = 64 * _MiB
    if cap >= 128 * _MiB:
        return 96 * _MiB
    return max(16 * _MiB, cap // 2)


def _lane_tile(L, itemsize, budget, forced=None, max_chunks=32):
    """Lane tile: full L if an 8-row tile fits the budget, else a lane-dense
    multiple of 128 (capped so unrolled in-kernel chunk loops stay short).
    Forced values are sanitized (128-multiple or full L) and clamped."""
    max_tl = max(128, budget // (8 * itemsize))
    if forced is not None:
        tl = int(forced)
        if tl >= L:
            return L
        tl = max(128, (tl // 128) * 128)
        return min(tl, max(128, (max_tl // 128) * 128))
    if L <= max_tl:
        return L
    return max(128, min((max_tl // 128) * 128, 128 * max_chunks))


def _row_tile(R, tl, itemsize, budget, forced=None, split_for_megacore=True):
    """Row tile: multiple of 8 (or full R) fitting the budget; optionally capped
    so the 'parallel' row axis yields >= 2 blocks (megacore)."""
    max_tr = max(8, (budget // max(1, tl * itemsize) // 8) * 8)
    if forced is not None:
        tr = min(max(8, _round_up(int(forced), 8)), max_tr)
        return R if tr >= R else tr
    tr = min(R, max_tr)
    if split_for_megacore and R > 8 and -(-R // tr) < 2:
        tr = _round_up(-(-R // 2), 8)
    return R if tr >= R else max(8, (tr // 8) * 8)


# ---------------------------------------------------------------------------
# Kernels
# ---------------------------------------------------------------------------

def _make_stats_kernel(tl, L, fold, ragged):
    """Pass-1 kernel over 2-D (R, L) = (N*C, L) data.

    fold=True (tl % 128 == 0): accumulate per-row, *per-lane* partial sums into
    a resident (TR, 128) accumulator using only lane-aligned VPU adds — the
    single 128-lane reduce happens once in the XLA finalize.  Ragged L tails
    are masked in-kernel (no jnp.pad of x).
    fold=False: tl == L (single L step), a plain per-row reduce is cheap.
    """
    if fold:
        n_chunks = tl // 128

        def kernel(x_ref, sum_ref, sumsq_ref):
            li = pl.program_id(1)

            @pl.when(li == 0)
            def _init():
                sum_ref[...] = jnp.zeros_like(sum_ref)
                sumsq_ref[...] = jnp.zeros_like(sumsq_ref)

            x = x_ref[...]                                          # (TR, TL)
            if ragged:
                lane = jax.lax.broadcasted_iota(jnp.int32, x.shape, 1)
                x = jnp.where(lane + li * tl < L, x, jnp.zeros_like(x))
            acc = x[:, 0:128].astype(jnp.float32)
            acc2 = acc * acc
            for k in range(1, n_chunks):
                c = x[:, k * 128:(k + 1) * 128].astype(jnp.float32)
                acc = acc + c
                acc2 = acc2 + c * c
            sum_ref[...] += acc
            sumsq_ref[...] += acc2

        return kernel

    def kernel(x_ref, sum_ref, sumsq_ref):
        x = x_ref[...].astype(jnp.float32)                          # (TR, L)
        sum_ref[...] = jnp.sum(x, axis=1, keepdims=True)
        sumsq_ref[...] = jnp.sum(x * x, axis=1, keepdims=True)

    return kernel


def _make_normalize_kernel(tl, chunked):
    """Pass-2 kernel: y = x * scale + shift on 2-D (R, L) tiles.

    chunked=True: scale/shift arrive pre-broadcast to (TR, 128) so every chunk
    FMA is lane-aligned vreg reuse — no per-tile 1->128 lane broadcast."""
    if chunked:
        n_chunks = tl // 128

        def kernel(x_ref, scale_ref, shift_ref, out_ref):
            scale = scale_ref[...]                                  # (TR, 128)
            shift = shift_ref[...]
            for k in range(n_chunks):
                sl = slice(k * 128, (k + 1) * 128)
                out_ref[:, sl] = (x_ref[:, sl] * scale + shift).astype(out_ref.dtype)

        return kernel

    def kernel(x_ref, scale_ref, shift_ref, out_ref):
        out_ref[...] = (x_ref[...] * scale_ref[...] + shift_ref[...]).astype(out_ref.dtype)

    return kernel


def _make_fused_kernel(tl_out, n_steps, compute_dtype):
    """Fused small-tensor path: x is VMEM-resident (constant index map).

    Stats + per-channel scale/shift are computed once at grid step 0 into VMEM
    scratch; every step writes one normalized L-slice so the output writeback
    pipelines against compute."""

    def kernel(coeffs_ref, x_ref, gamma_ref, beta_ref, rmean_ref, rmsq_ref,
               out_ref, mean_ref, msq_ref, scale_sc, shift_sc):
        i = pl.program_id(0)

        @pl.when(i == 0)
        def _stats():
            eps = coeffs_ref[0]
            new_coeff = coeffs_ref[1]
            inv_count = coeffs_ref[2]
            x = x_ref[...].astype(jnp.float32)                      # (N, C, L)
            xs = jnp.sum(x, axis=0)                                 # (C, L) VPU adds
            xs2 = jnp.sum(x * x, axis=0)                            # (C, L)
            bmean = jnp.sum(xs, axis=1, keepdims=True) * inv_count  # (C, 1)
            bmsq = jnp.sum(xs2, axis=1, keepdims=True) * inv_count  # (C, 1)
            old_coeff = 1.0 - new_coeff
            mean = new_coeff * bmean + old_coeff * rmean_ref[...]
            msq = new_coeff * bmsq + old_coeff * rmsq_ref[...]
            inv_std = jax.lax.rsqrt(eps + msq - mean * mean)
            scale = gamma_ref[...] * inv_std                        # (C, 1)
            shift = beta_ref[...] - mean * scale                    # (C, 1)
            mean_ref[...] = mean
            msq_ref[...] = msq
            scale_sc[...] = scale.astype(compute_dtype)
            shift_sc[...] = shift.astype(compute_dtype)

        scale = scale_sc[...]
        shift = shift_sc[...]
        if n_steps == 1:
            xb = x_ref[...]
        else:
            start = pl.multiple_of(i * tl_out, tl_out)
            xb = x_ref[:, :, pl.ds(start, tl_out)]                  # (N, C, tl_out)
        out_ref[...] = (xb * scale + shift).astype(out_ref.dtype)

    return kernel


# ---------------------------------------------------------------------------
# Wrappers
# ---------------------------------------------------------------------------

def _fused_out_tile(N, C, L, itemsize):
    """Pipeline the output writeback only when it pays (lane-dense, >= ~1 MiB)."""
    if L % 256 != 0 or N * C * L * itemsize < (1 << 20):
        return L
    for steps in (8, 4, 2):
        if L % steps == 0 and (L // steps) % 128 == 0:
            return L // steps
    return L


def _vbn_fused(x, gamma3, beta3, ref_mean3, ref_mean_sq3, eps, new_coeff,
               vmem_limit, compute_dtype):
    N, C, L = x.shape
    coeffs = jnp.array([eps, new_coeff, 1.0 / (N * L)], jnp.float32)
    gamma2 = gamma3.reshape(C, 1)
    beta2 = beta3.reshape(C, 1)
    rmean2 = ref_mean3.reshape(C, 1)
    rmsq2 = ref_mean_sq3.reshape(C, 1)

    tl_out = _fused_out_tile(N, C, L, x.dtype.itemsize)
    n_steps = L // tl_out

    out, mean, mean_sq = pl.pallas_call(
        _make_fused_kernel(tl_out, n_steps, compute_dtype),
        grid=(n_steps,),
        in_specs=[
            pl.BlockSpec(memory_space=pltpu.MemorySpace.SMEM),       # coeffs
            pl.BlockSpec((N, C, L), lambda i: (0, 0, 0)),            # x (resident)
            pl.BlockSpec((C, 1), lambda i: (0, 0)),                  # gamma
            pl.BlockSpec((C, 1), lambda i: (0, 0)),                  # beta
            pl.BlockSpec((C, 1), lambda i: (0, 0)),                  # ref_mean
            pl.BlockSpec((C, 1), lambda i: (0, 0)),                  # ref_mean_sq
        ],
        out_specs=[
            pl.BlockSpec((N, C, tl_out), lambda i: (0, 0, i)),       # out (pipelined)
            pl.BlockSpec((C, 1), lambda i: (0, 0)),                  # mean
            pl.BlockSpec((C, 1), lambda i: (0, 0)),                  # mean_sq
        ],
        out_shape=[
            jax.ShapeDtypeStruct((N, C, L), x.dtype),
            jax.ShapeDtypeStruct((C, 1), jnp.float32),
            jax.ShapeDtypeStruct((C, 1), jnp.float32),
        ],
        scratch_shapes=[
            pltpu.VMEM((C, 1), compute_dtype),
            pltpu.VMEM((C, 1), compute_dtype),
        ],
        compiler_params=pltpu.CompilerParams(
            dimension_semantics=("arbitrary",),
            vmem_limit_bytes=vmem_limit,
        ),
    )(coeffs, x, gamma2, beta2, rmean2, rmsq2)

    return out, mean.reshape(1, C, 1), mean_sq.reshape(1, C, 1)


def _vbn_two_pass(x, gamma3, beta3, ref_mean3, ref_mean_sq3, eps, new_coeff,
                  vmem_limit, compute_dtype, n_tile=None, l_tile=None):
    N, C, L = x.shape
    R = N * C
    itemsize = x.dtype.itemsize
    x2 = x.reshape(R, L)                         # contiguous reshape: no HBM copy
    forced_rows = None if n_tile is None else int(n_tile) * C

    # ------------------- pass 1: per-row partial sums -------------------
    stats_budget = max(vmem_limit // 3, 256 * 1024)
    tl_s = _lane_tile(L, itemsize, stats_budget, forced=l_tile)
    tr_s = _row_tile(R, tl_s, itemsize, stats_budget, forced=forced_rows)
    grid_s = (pl.cdiv(R, tr_s), pl.cdiv(L, tl_s))
    fold = (tl_s % 128 == 0)
    lanes_out = 128 if fold else 1
    ragged_l = (L % tl_s != 0)

    sums, sumsq = pl.pallas_call(
        _make_stats_kernel(tl_s, L, fold, ragged_l),
        grid=grid_s,
        in_specs=[pl.BlockSpec((tr_s, tl_s), lambda ri, li: (ri, li))],
        out_specs=[
            pl.BlockSpec((tr_s, lanes_out), lambda ri, li: (ri, 0)),
            pl.BlockSpec((tr_s, lanes_out), lambda ri, li: (ri, 0)),
        ],
        out_shape=[
            jax.ShapeDtypeStruct((R, lanes_out), jnp.float32),
            jax.ShapeDtypeStruct((R, lanes_out), jnp.float32),
        ],
        compiler_params=pltpu.CompilerParams(
            dimension_semantics=("parallel", "arbitrary"),
            vmem_limit_bytes=vmem_limit,
        ),
    )(x2)

    # --------- tiny per-channel finalize (plain XLA, runs exactly once) ---------
    inv_count = 1.0 / (N * L)
    row_sum = jnp.sum(sums, axis=1).reshape(N, C)
    row_sq = jnp.sum(sumsq, axis=1).reshape(N, C)
    batch_mean = (jnp.sum(row_sum, axis=0) * inv_count).reshape(1, C, 1)
    batch_msq = (jnp.sum(row_sq, axis=0) * inv_count).reshape(1, C, 1)
    old_coeff = 1.0 - new_coeff
    mean = new_coeff * batch_mean + old_coeff * ref_mean3
    mean_sq = new_coeff * batch_msq + old_coeff * ref_mean_sq3
    inv_std = jax.lax.rsqrt(eps + mean_sq - mean * mean)
    scale_c = gamma3 * inv_std                              # (1, C, 1) f32
    shift_c = beta3 - mean * scale_c                        # (1, C, 1) f32

    # ------------------- pass 2: y = x * scale + shift -------------------
    norm_budget = max(vmem_limit // 5, 256 * 1024)
    tl_n = _lane_tile(L, itemsize, norm_budget, forced=l_tile)
    tr_n = _row_tile(R, tl_n, itemsize, norm_budget, forced=forced_rows)
    grid_n = (pl.cdiv(R, tr_n), pl.cdiv(L, tl_n))
    chunked = (tl_n % 128 == 0)
    lane_b = 128 if chunked else 1

    # Per-row scale/shift, pre-broadcast to a full lane tile (tiny arrays).
    scale_r = jnp.broadcast_to(scale_c.reshape(1, C), (N, C)).reshape(R, 1)
    shift_r = jnp.broadcast_to(shift_c.reshape(1, C), (N, C)).reshape(R, 1)
    scale_r = jnp.broadcast_to(scale_r, (R, lane_b)).astype(compute_dtype)
    shift_r = jnp.broadcast_to(shift_r, (R, lane_b)).astype(compute_dtype)

    out2 = pl.pallas_call(
        _make_normalize_kernel(tl_n, chunked),
        grid=grid_n,
        in_specs=[
            pl.BlockSpec((tr_n, tl_n), lambda ri, li: (ri, li)),
            pl.BlockSpec((tr_n, lane_b), lambda ri, li: (ri, 0)),
            pl.BlockSpec((tr_n, lane_b), lambda ri, li: (ri, 0)),
        ],
        out_specs=pl.BlockSpec((tr_n, tl_n), lambda ri, li: (ri, li)),
        out_shape=jax.ShapeDtypeStruct((R, L), x.dtype),
        compiler_params=pltpu.CompilerParams(
            dimension_semantics=("parallel", "parallel"),
            vmem_limit_bytes=vmem_limit,
        ),
    )(x2, scale_r, shift_r)

    return out2.reshape(N, C, L), mean, mean_sq


def virtual_batch_norm_1d(x, gamma, beta, ref_mean=None, ref_mean_sq=None,
                          eps=1e-5, mode="auto", n_tile=None, l_tile=None):
    """Forward pass matching VirtualBatchNorm1d.forward.

    Returns (out, mean, mean_sq) with mean / mean_sq of shape (1, C, 1).
    """
    N, C, L = x.shape
    gamma3 = jnp.asarray(gamma, jnp.float32).reshape(1, C, 1)
    beta3 = jnp.asarray(beta, jnp.float32).reshape(1, C, 1)

    if ref_mean is None or ref_mean_sq is None:
        new_coeff = 1.0                          # reference-batch pass
        ref_mean3 = jnp.zeros((1, C, 1), jnp.float32)
        ref_mean_sq3 = jnp.zeros((1, C, 1), jnp.float32)
    else:
        new_coeff = 1.0 / (N + 1.0)              # train pass: blend with ref stats
        ref_mean3 = jnp.asarray(ref_mean, jnp.float32).reshape(1, C, 1)
        ref_mean_sq3 = jnp.asarray(ref_mean_sq, jnp.float32).reshape(1, C, 1)

    compute_dtype = x.dtype if x.dtype in (jnp.bfloat16, jnp.float16) else jnp.float32
    itemsize = x.dtype.itemsize
    vmem_limit = _vmem_limit_bytes()

    if mode == "auto":
        # Fused = 2 HBM passes of x (read + write) vs 3 for two-pass; take it
        # whenever x plus its f32 stats intermediates fits the scoped budget.
        use_fused = N * C * L * (2 * itemsize + 16) <= vmem_limit
    else:
        use_fused = (mode == "fused")

    if use_fused:
        return _vbn_fused(x, gamma3, beta3, ref_mean3, ref_mean_sq3,
                          eps, new_coeff, vmem_limit, compute_dtype)
    return _vbn_two_pass(x, gamma3, beta3, ref_mean3, ref_mean_sq3,
                         eps, new_coeff, vmem_limit, compute_dtype,
                         n_tile=n_tile, l_tile=l_tile)


# ---------------------------------------------------------------------------
# Pure-JAX reference (mirrors the PyTorch forward) and self-test
# ---------------------------------------------------------------------------

def _reference_vbn(x, gamma, beta, ref_mean, ref_mean_sq, eps=1e-5):
    mean = jnp.mean(jnp.mean(x, axis=2, keepdims=True), axis=0, keepdims=True)
    mean_sq = jnp.mean(jnp.mean(x * x, axis=2, keepdims=True), axis=0, keepdims=True)
    if ref_mean is not None and ref_mean_sq is not None:
        new_coeff = 1.0 / (x.shape[0] + 1.0)
        old_coeff = 1.0 - new_coeff
        mean = new_coeff * mean + old_coeff * ref_mean
        mean_sq = new_coeff * mean_sq + old_coeff * ref_mean_sq
    std = jnp.sqrt(eps + mean_sq - mean ** 2)
    out = (x - mean) / std * gamma + beta
    return out, mean, mean_sq


if __name__ == "__main__":
    key = jax.random.PRNGKey(0)
    ks = jax.random.split(key, 9)

    def _run_case(N, C, L, key_a, key_b, key_g, **kw):
        gamma = 1.0 + 0.02 * jax.random.normal(key_g, (1, C, 1), dtype=jnp.float32)
        beta = jnp.zeros((1, C, 1), dtype=jnp.float32)
        x_refb = jax.random.normal(key_a, (N, C, L), dtype=jnp.float32)
        x_train = jax.random.normal(key_b, (N, C, L), dtype=jnp.float32)

        o1, m1, s1 = virtual_batch_norm_1d(x_refb, gamma, beta, None, None, **kw)
        o2, m2, s2 = virtual_batch_norm_1d(x_train, gamma, beta, m1, s1, **kw)
        jax.block_until_ready((o1, m1, s1, o2, m2, s2))

        e1, em1, es1 = _reference_vbn(x_refb, gamma, beta, None, None)
        e2, em2, es2 = _reference_vbn(x_train, gamma, beta, em1, es1)
        for got, exp in ((o1, e1), (m1, em1), (s1, es1),
                         (o2, e2), (m2, em2), (s2, es2)):
            np.testing.assert_allclose(np.asarray(got), np.asarray(exp),
                                       rtol=1e-4, atol=1e-4)

    # A: tiny shape -> fused single-step path (auto-selected).
    _run_case(2, 4, 16, ks[0], ks[1], ks[2])
    # B: forced two-pass, lane-dense fold with a ragged L tail (448 % 128 != 0).
    _run_case(4, 8, 448, ks[3], ks[4], ks[2],
              mode="two_pass", n_tile=2, l_tile=128)
    # C: forced two-pass, auto tiles: small odd C, ragged row blocks,
    #    megacore row split, un-chunked (full-L) normalize.
    _run_case(3, 4, 200, ks[5], ks[6], ks[2], mode="two_pass")
    # D: fused path with pipelined output writeback (L % 1024 == 0, ~1 MiB).
    _run_case(2, 64, 2048, ks[7], ks[8], ks[2], mode="fused")

    print("KERNEL_OK")
</pallas_src>

<mosaic_0001>
module attributes {stable_mosaic.version = 11 : i64} {
  func.func @kernel(%arg0: i32, %arg1: memref<3xf32, #tpu.memory_space<smem>>, %arg2: memref<2x4x16xf32, #tpu.memory_space<vmem>>, %arg3: memref<4x1xf32, #tpu.memory_space<vmem>>, %arg4: memref<4x1xf32, #tpu.memory_space<vmem>>, %arg5: memref<4x1xf32, #tpu.memory_space<vmem>>, %arg6: memref<4x1xf32, #tpu.memory_space<vmem>>, %arg7: memref<2x4x16xf32, #tpu.memory_space<vmem>>, %arg8: memref<4x1xf32, #tpu.memory_space<vmem>>, %arg9: memref<4x1xf32, #tpu.memory_space<vmem>>, %arg10: memref<4x1xf32, #tpu.memory_space<vmem>>, %arg11: memref<4x1xf32, #tpu.memory_space<vmem>>) attributes {dimension_semantics = [#tpu.dimension_semantics<arbitrary>], iteration_bounds = array<i64: 1>, scalar_prefetch = 0 : i64, scratch_operands = 2 : i64, tpu.core_type = #tpu.core_type<tc>, window_params = [{transform_indices = @transform_0, window_bounds = array<i64: 3>}, {pipeline_mode = #tpu.pipeline_mode<synchronous>, transform_indices = @transform_1, window_bounds = array<i64: 2, 4, 16>}, {pipeline_mode = #tpu.pipeline_mode<synchronous>, transform_indices = @transform_2, window_bounds = array<i64: 4, 1>}, {pipeline_mode = #tpu.pipeline_mode<synchronous>, transform_indices = @transform_3, window_bounds = array<i64: 4, 1>}, {pipeline_mode = #tpu.pipeline_mode<synchronous>, transform_indices = @transform_4, window_bounds = array<i64: 4, 1>}, {pipeline_mode = #tpu.pipeline_mode<synchronous>, transform_indices = @transform_5, window_bounds = array<i64: 4, 1>}, {transform_indices = @transform_6, window_bounds = array<i64: 2, 4, 16>}, {pipeline_mode = #tpu.pipeline_mode<synchronous>, transform_indices = @transform_7, window_bounds = array<i64: 4, 1>}, {pipeline_mode = #tpu.pipeline_mode<synchronous>, transform_indices = @transform_8, window_bounds = array<i64: 4, 1>}]} {
    %c0_i32 = arith.constant 0 : i32
    %0 = arith.cmpi eq, %arg0, %c0_i32 : i32
    %1 = arith.extui %0 : i1 to i32
    %c0_i32_0 = arith.constant 0 : i32
    %2 = arith.cmpi ne, %1, %c0_i32_0 : i32
    scf.if %2 {
      %c0_10 = arith.constant 0 : index
      %13 = memref.load %arg1[%c0_10] : memref<3xf32, #tpu.memory_space<smem>>
      %c1 = arith.constant 1 : index
      %14 = memref.load %arg1[%c1] : memref<3xf32, #tpu.memory_space<smem>>
      %c2 = arith.constant 2 : index
      %15 = memref.load %arg1[%c2] : memref<3xf32, #tpu.memory_space<smem>>
      %c0_11 = arith.constant 0 : index
      %c0_12 = arith.constant 0 : index
      %c0_13 = arith.constant 0 : index
      %16 = vector.load %arg2[%c0_11, %c0_12, %c0_13] : memref<2x4x16xf32, #tpu.memory_space<vmem>>, vector<2x4x16xf32>
      %cst = arith.constant dense<0.000000e+00> : vector<4x16xf32>
      %17 = vector.multi_reduction <add>, %16, %cst [0] : vector<2x4x16xf32> to vector<4x16xf32>
      %18 = arith.mulf %16, %16 : vector<2x4x16xf32>
      %cst_14 = arith.constant dense<0.000000e+00> : vector<4x16xf32>
      %19 = vector.multi_reduction <add>, %18, %cst_14 [0] : vector<2x4x16xf32> to vector<4x16xf32>
      %cst_15 = arith.constant dense<0.000000e+00> : vector<4xf32>
      %20 = vector.multi_reduction <add>, %17, %cst_15 [1] : vector<4x16xf32> to vector<4xf32>
      %21 = vector.shape_cast %20 : vector<4xf32> to vector<4x1xf32>
      %22 = vector.broadcast %15 : f32 to vector<4x1xf32>
      %23 = arith.mulf %21, %22 : vector<4x1xf32>
      %cst_16 = arith.constant dense<0.000000e+00> : vector<4xf32>
      %24 = vector.multi_reduction <add>, %19, %cst_16 [1] : vector<4x16xf32> to vector<4xf32>
      %25 = vector.shape_cast %24 : vector<4xf32> to vector<4x1xf32>
      %26 = vector.broadcast %15 : f32 to vector<4x1xf32>
      %27 = arith.mulf %25, %26 : vector<4x1xf32>
      %cst_17 = arith.constant 1.000000e+00 : f32
      %28 = arith.subf %cst_17, %14 : f32
      %29 = vector.broadcast %14 : f32 to vector<4x1xf32>
      %30 = arith.mulf %29, %23 : vector<4x1xf32>
      %c0_18 = arith.constant 0 : index
      %c0_19 = arith.constant 0 : index
      %31 = vector.load %arg5[%c0_18, %c0_19] : memref<4x1xf32, #tpu.memory_space<vmem>>, vector<4x1xf32>
      %32 = vector.broadcast %28 : f32 to vector<4x1xf32>
      %33 = arith.mulf %32, %31 : vector<4x1xf32>
      %34 = arith.addf %30, %33 : vector<4x1xf32>
      %35 = vector.broadcast %14 : f32 to vector<4x1xf32>
      %36 = arith.mulf %35, %27 : vector<4x1xf32>
      %c0_20 = arith.constant 0 : index
      %c0_21 = arith.constant 0 : index
      %37 = vector.load %arg6[%c0_20, %c0_21] : memref<4x1xf32, #tpu.memory_space<vmem>>, vector<4x1xf32>
      %38 = vector.broadcast %28 : f32 to vector<4x1xf32>
      %39 = arith.mulf %38, %37 : vector<4x1xf32>
      %40 = arith.addf %36, %39 : vector<4x1xf32>
      %41 = vector.broadcast %13 : f32 to vector<4x1xf32>
      %42 = arith.addf %41, %40 : vector<4x1xf32>
      %43 = arith.mulf %34, %34 : vector<4x1xf32>
      %44 = arith.subf %42, %43 : vector<4x1xf32>
      %45 = math.rsqrt %44 : vector<4x1xf32>
      %c0_22 = arith.constant 0 : index
      %c0_23 = arith.constant 0 : index
      %46 = vector.load %arg3[%c0_22, %c0_23] : memref<4x1xf32, #tpu.memory_space<vmem>>, vector<4x1xf32>
      %47 = arith.mulf %46, %45 : vector<4x1xf32>
      %c0_24 = arith.constant 0 : index
      %c0_25 = arith.constant 0 : index
      %48 = vector.load %arg4[%c0_24, %c0_25] : memref<4x1xf32, #tpu.memory_space<vmem>>, vector<4x1xf32>
      %49 = arith.mulf %34, %47 : vector<4x1xf32>
      %50 = arith.subf %48, %49 : vector<4x1xf32>
      %c0_26 = arith.constant 0 : index
      %c0_27 = arith.constant 0 : index
      %51 = vector.load %arg8[%c0_26, %c0_27] : memref<4x1xf32, #tpu.memory_space<vmem>>, vector<4x1xf32>
      tpu.vector_store %arg8[%c0_26, %c0_27], %34 {strides = array<i32>} : memref<4x1xf32, #tpu.memory_space<vmem>>, vector<4x1xf32>,
      %c0_28 = arith.constant 0 : index
      %c0_29 = arith.constant 0 : index
      %52 = vector.load %arg9[%c0_28, %c0_29] : memref<4x1xf32, #tpu.memory_space<vmem>>, vector<4x1xf32>
      tpu.vector_store %arg9[%c0_28, %c0_29], %40 {strides = array<i32>} : memref<4x1xf32, #tpu.memory_space<vmem>>, vector<4x1xf32>,
      %c0_30 = arith.constant 0 : index
      %c0_31 = arith.constant 0 : index
      %53 = vector.load %arg10[%c0_30, %c0_31] : memref<4x1xf32, #tpu.memory_space<vmem>>, vector<4x1xf32>
      tpu.vector_store %arg10[%c0_30, %c0_31], %47 {strides = array<i32>} : memref<4x1xf32, #tpu.memory_space<vmem>>, vector<4x1xf32>,
      %c0_32 = arith.constant 0 : index
      %c0_33 = arith.constant 0 : index
      %54 = vector.load %arg11[%c0_32, %c0_33] : memref<4x1xf32, #tpu.memory_space<vmem>>, vector<4x1xf32>
      tpu.vector_store %arg11[%c0_32, %c0_33], %50 {strides = array<i32>} : memref<4x1xf32, #tpu.memory_space<vmem>>, vector<4x1xf32>,
    } else {
    }
    %c0 = arith.constant 0 : index
    %c0_1 = arith.constant 0 : index
    %3 = vector.load %arg10[%c0, %c0_1] : memref<4x1xf32, #tpu.memory_space<vmem>>, vector<4x1xf32>
    %c0_2 = arith.constant 0 : index
    %c0_3 = arith.constant 0 : index
    %4 = vector.load %arg11[%c0_2, %c0_3] : memref<4x1xf32, #tpu.memory_space<vmem>>, vector<4x1xf32>
    %c0_4 = arith.constant 0 : index
    %c0_5 = arith.constant 0 : index
    %c0_6 = arith.constant 0 : index
    %5 = vector.load %arg2[%c0_4, %c0_5, %c0_6] : memref<2x4x16xf32, #tpu.memory_space<vmem>>, vector<2x4x16xf32>
    %6 = vector.shape_cast %3 : vector<4x1xf32> to vector<1x4x1xf32>
    %7 = vector.broadcast %6 : vector<1x4x1xf32> to vector<2x4x16xf32>
    %8 = arith.mulf %5, %7 : vector<2x4x16xf32>
    %9 = vector.shape_cast %4 : vector<4x1xf32> to vector<1x4x1xf32>
    %10 = vector.broadcast %9 : vector<1x4x1xf32> to vector<2x4x16xf32>
    %11 = arith.addf %8, %10 : vector<2x4x16xf32>
    %c0_7 = arith.constant 0 : index
    %c0_8 = arith.constant 0 : index
    %c0_9 = arith.constant 0 : index
    %12 = vector.load %arg7[%c0_7, %c0_8, %c0_9] : memref<2x4x16xf32, #tpu.memory_space<vmem>>, vector<2x4x16xf32>
    tpu.vector_store %arg7[%c0_7, %c0_8, %c0_9], %11 {strides = array<i32>} : memref<2x4x16xf32, #tpu.memory_space<vmem>>, vector<2x4x16xf32>,
    return
  }
  func.func @transform_0(%arg0: i32) -> i32 {
    %c0_i32 = arith.constant 0 : i32
    %c0_i32_0 = arith.constant 0 : i32
    return %c0_i32 : i32
  }
  func.func @transform_1(%arg0: i32) -> (i32, i32, i32) {
    %c0_i32 = arith.constant 0 : i32
    %c0_i32_0 = arith.constant 0 : i32
    %c0_i32_1 = arith.constant 0 : i32
    %c0_i32_2 = arith.constant 0 : i32
    return %c0_i32, %c0_i32_0, %c0_i32_1 : i32, i32, i32
  }
  func.func @transform_2(%arg0: i32) -> (i32, i32) {
    %c0_i32 = arith.constant 0 : i32
    %c0_i32_0 = arith.constant 0 : i32
    %c0_i32_1 = arith.constant 0 : i32
    return %c0_i32, %c0_i32_0 : i32, i32
  }
  func.func @transform_3(%arg0: i32) -> (i32, i32) {
    %c0_i32 = arith.constant 0 : i32
    %c0_i32_0 = arith.constant 0 : i32
    %c0_i32_1 = arith.constant 0 : i32
    return %c0_i32, %c0_i32_0 : i32, i32
  }
  func.func @transform_4(%arg0: i32) -> (i32, i32) {
    %c0_i32 = arith.constant 0 : i32
    %c0_i32_0 = arith.constant 0 : i32
    %c0_i32_1 = arith.constant 0 : i32
    return %c0_i32, %c0_i32_0 : i32, i32
  }
  func.func @transform_5(%arg0: i32) -> (i32, i32) {
    %c0_i32 = arith.constant 0 : i32
    %c0_i32_0 = arith.constant 0 : i32
    %c0_i32_1 = arith.constant 0 : i32
    return %c0_i32, %c0_i32_0 : i32, i32
  }
  func.func @transform_6(%arg0: i32) -> (i32, i32, i32) {
    %c0_i32 = arith.constant 0 : i32
    %c0_i32_0 = arith.constant 0 : i32
    %c0_i32_1 = arith.constant 0 : i32
    return %c0_i32, %c0_i32_0, %arg0 : i32, i32, i32
  }
  func.func @transform_7(%arg0: i32) -> (i32, i32) {
    %c0_i32 = arith.constant 0 : i32
    %c0_i32_0 = arith.constant 0 : i32
    %c0_i32_1 = arith.constant 0 : i32
    return %c0_i32, %c0_i32_0 : i32, i32
  }
  func.func @transform_8(%arg0: i32) -> (i32, i32) {
    %c0_i32 = arith.constant 0 : i32
    %c0_i32_0 = arith.constant 0 : i32
    %c0_i32_1 = arith.constant 0 : i32
    return %c0_i32, %c0_i32_0 : i32, i32
  }
}

</mosaic_0001>

<llo_original>
// kernel: tpu_custom_call.1
$region0: #{tpu_custom_call.1}
  #allocation0 [shape = 'u32[]', space=smem, size = 0x4, offset = 0x4, fixed_abs, tag = 'smem constant byte address 0x4 - core index']
  #allocation1 [shape = 'u32[144,128]{1,0:T(1,128)}', space=vmem, size = 0x12000, scoped, tag = 'internal scratch']
  #allocation2 [shape = 'f32[4,1]{1,0:T(4,128)}', space=vmem, size = 0x800, scoped, tag = 'scratch operand']
  #allocation3 [shape = 'f32[4,1]{1,0:T(4,128)}', space=vmem, size = 0x800, scoped, tag = 'scratch operand']
  %s0 = inlined_call_operand.vmem [shape: f32[3], index: 0, kind: input, shape index: {}]
  %s1 = inlined_call_operand.vmem [shape: f32[2,4,16], index: 1, kind: input, shape index: {}]
  %s2 = inlined_call_operand.vmem [shape: f32[4,1], index: 2, kind: input, shape index: {}]
  %s3 = inlined_call_operand.vmem [shape: f32[4,1], index: 3, kind: input, shape index: {}]
  %s4 = inlined_call_operand.vmem [shape: f32[4,1], index: 4, kind: input, shape index: {}]
  %s5 = inlined_call_operand.vmem [shape: f32[4,1], index: 5, kind: input, shape index: {}]
  %s6 = inlined_call_operand.hbm [shape: f32[2,4,16], index: 6, kind: output, shape index: {0}]
  %s7 = inlined_call_operand.vmem [shape: f32[4,1], index: 7, kind: output, shape index: {1}]
  %s8 = inlined_call_operand.vmem [shape: f32[4,1], index: 8, kind: output, shape index: {2}]
  %9 = xla_tuple %s6, %s7, %s8
  %s10 = sld [smem:[#allocation0]]
  $region58: #{tpu_custom_call.1} parent=0
    _
  %s12 = ssub.s32 1, %s10
  %s13 = scalar_select 0, %s12, %s10
  $region1: #{tpu_custom_call.1} parent=0
    #allocation4 [shape = 'u8[512]{0}', space=smem, size = 0x200, scoped, tag = 'input window, operand 0, single buffered']
    #allocation5 [shape = 's32[1]{0}', space=sflag, size = 0x4, scoped, tag = 'scoped memory for tpu_custom_call.1']
    #allocation6 [shape = 's32[1]{0}', space=sflag, size = 0x4, scoped, tag = 'scoped memory for tpu_custom_call.1']
    #allocation7 [shape = 'u8[4096]{0}', space=vmem, size = 0x1000, scoped, tag = 'output window, operand 0, single buffered']
    %14 = vsyncpa [#allocation6], 0
    %15 = vsyncpa [#allocation5], 0
    // Predicated region
    $region2: #{tpu_custom_call.1} parent=1 // pred_check
      _
    $region3: #{tpu_custom_call.1} parent=1 // pred_check_branch
      %17 = sbr.rel (0) target = $region5
    $region4: #{tpu_custom_call.1} parent=1 // pred_region
      %s19 = ssub.s32 16, 16
      %20 = vsyncadd [#allocation6], %s19
      %s22 = sshll.u32 %s0, 4
      %s23 = int_to_ptr.vmem [resolvable:$true] %s22
      %25 = dma.vmem_to_smem %s23, 16, [#allocation4], [#allocation6]
    $region5: #{tpu_custom_call.1} parent=1 // pred_fallthru
      _
    // Predicated region
    $region6: #{tpu_custom_call.1} parent=1 // pred_check
      _
    $region7: #{tpu_custom_call.1} parent=1 // pred_check_branch
      %27 = sbr.rel (0) target = $region9
    $region8: #{tpu_custom_call.1} parent=1 // pred_region
      _
    $region9: #{tpu_custom_call.1} parent=1 // pred_fallthru
      _
    // Predicated region
    $region10: #{tpu_custom_call.1} parent=1 // pred_check
      _
    $region11: #{tpu_custom_call.1} parent=1 // pred_check_branch
      %29 = sbr.rel (0) target = $region13
    $region12: #{tpu_custom_call.1} parent=1 // pred_region
      _
    $region13: #{tpu_custom_call.1} parent=1 // pred_fallthru
      _
    // Predicated region
    $region14: #{tpu_custom_call.1} parent=1 // pred_check
      _
    $region15: #{tpu_custom_call.1} parent=1 // pred_check_branch
      %31 = sbr.rel (0) target = $region17
    $region16: #{tpu_custom_call.1} parent=1 // pred_region
      _
    $region17: #{tpu_custom_call.1} parent=1 // pred_fallthru
      _
    // Predicated region
    $region18: #{tpu_custom_call.1} parent=1 // pred_check
      _
    $region19: #{tpu_custom_call.1} parent=1 // pred_check_branch
      %33 = sbr.rel (0) target = $region21
    $region20: #{tpu_custom_call.1} parent=1 // pred_region
      _
    $region21: #{tpu_custom_call.1} parent=1 // pred_fallthru
      _
    // Predicated region
    $region22: #{tpu_custom_call.1} parent=1 // pred_check
      _
    $region23: #{tpu_custom_call.1} parent=1 // pred_check_branch
      %35 = sbr.rel (0) target = $region25
    $region24: #{tpu_custom_call.1} parent=1 // pred_region
      _
    $region25: #{tpu_custom_call.1} parent=1 // pred_fallthru
      _
    // Predicated region
    $region26: #{tpu_custom_call.1} parent=1 // pred_check
      _
    $region27: #{tpu_custom_call.1} parent=1 // pred_check_branch
      %37 = sbr.rel (0) target = $region29
    $region28: #{tpu_custom_call.1} parent=1 // pred_region
      %38 = dma.done [#allocation6], 16
    $region29: #{tpu_custom_call.1} parent=1 // pred_fallthru
      _
    %39 = sfence
    %p40 = scmp.eq.s32.totalorder 0, 0
    // Predicated region
    $region30: #{tpu_custom_call.1} parent=1 // pred_check
      %p41 = pneg %p40
    $region31: #{tpu_custom_call.1} parent=1 // pred_check_branch
      %43 = sbr.rel (%p41) target = $region33
    $region32: #{tpu_custom_call.1} parent=1 // pred_region
      %s44 = sld [smem:[#allocation4]]
      %s45 = sld [smem:[#allocation4 + $0x1]]
      %s46 = sld [smem:[#allocation4 + $0x2]]
      %v47 = vld [vmem:[%s1] sm:$0xf]
      %v48 = vld [vmem:[%s1 + $0x4] sm:$0xf]
      %vm49 = vcmask 125952
      %v50 = vsel %vm49, %v47, 0.0
      %v51 = vsel %vm49, %v48, 0.0
      %v52 = vadd.f32 %v50, %v51
      %v53 = vmul.f32 %v47, %v47
      %v54 = vmul.f32 %v48, %v48
      %v55 = vsel %vm49, %v53, 0.0
      %v56 = vsel %vm49, %v54, 0.0
      %v57 = vadd.f32 %v55, %v56
      %v58 = vsel %vm49, %v52, 0.0
      %59 = vadd.xlane.f32.xlu0 %v58
      %v60 = vpop.xlane.xlu0 %59
      %v61 = vstv %s46
      %v62 = vmul.f32 %v60, %v61
      %v63 = vsel %vm49, %v57, 0.0
      %64 = vadd.xlane.f32.xlu0 %v63
      %v65 = vpop.xlane.xlu0 %64
      %v66 = vmul.f32 %v65, %v61
      %s67 = ssub.f32 1.0, %s45
      %v68 = vstv %s45
      %v69 = vmul.f32 %v68, %v62
      %v70 = vld [vmem:[%s4] sm:$0xf]
      %v71 = vstv %s67
      %v72 = vmul.f32 %v71, %v70
      %v73 = vadd.f32 %v69, %v72
      %v74 = vmul.f32 %v68, %v66
      %v75 = vld [vmem:[%s5] sm:$0xf]
      %v76 = vmul.f32 %v71, %v75
      %v77 = vadd.f32 %v74, %v76
      %v78 = vstv %s44
      %v79 = vadd.f32 %v78, %v77
      %v80 = vmul.f32 %v73, %v73
      %v81 = vsub.f32 %v79, %v80
      %v82 = vrsqrt.pop %v81
      %v83 = vld [vmem:[%s2] sm:$0xf]
      %v84 = vmul.f32 %v83, %v82
      %v85 = vld [vmem:[%s3] sm:$0xf]
      %v86 = vmul.f32 %v73, %v84
      %v87 = vsub.f32 %v85, %v86
      %vm88 = vcmask 3072
      %89 = vst.msk [vmem:[%s7] sm:$0xf] %vm88, %v73
      %90 = vst.msk [vmem:[%s8] sm:$0xf] %vm88, %v77
      %91 = vst.msk [vmem:[#allocation2] sm:$0xf] %vm88, %v84
      %92 = vst.msk [vmem:[#allocation3] sm:$0xf] %vm88, %v87
    $region33: #{tpu_custom_call.1} parent=1 // pred_fallthru
      _
    %v93 = vld [vmem:[#allocation2] sm:$0xf]
    %v94 = vld [vmem:[#allocation3] sm:$0xf]
    %v95 = vld [vmem:[%s1] sm:$0xf]
    %v96 = vld [vmem:[%s1 + $0x4] sm:$0xf]
    %98 = vset.pattern.permute.xlu0 0
    %99 = vperm.xlu0 %98, %v93
    %v100 = vpop.permute.xlu0 %99
    %v102 = vmul.f32 %v95, %v100
    %v103 = vmul.f32 %v96, %v100
    %105 = vset.pattern.permute.xlu0 0
    %106 = vperm.xlu0 %105, %v94
    %v107 = vpop.permute.xlu0 %106
    %v109 = vadd.f32 %v102, %v107
    %v110 = vadd.f32 %v103, %v107
    %vm111 = vcmask 125952
    %112 = vst.msk [vmem:[#allocation7] sm:$0xf] %vm111, %v109
    %113 = vst.msk [vmem:[#allocation7 + $0x4] sm:$0xf] %vm111, %v110
    // Predicated region
    $region34: #{tpu_custom_call.1} parent=1 // pred_check
      _
    $region35: #{tpu_custom_call.1} parent=1 // pred_check_branch
      %115 = sbr.rel (0) target = $region37
    $region36: #{tpu_custom_call.1} parent=1 // pred_region
      %s117 = ssub.s32 128, 128
      %118 = vsyncadd [#allocation5], %s117
      %s119 = sshll.u32 [#allocation7], 4
      %s120 = int_to_ptr.vmem [resolvable:$true] %s119
      %125 = dma.vmem_to_hbm [thread:$0]  %s120, 128, %s6, [#allocation5], 64, 64, 4
    $region37: #{tpu_custom_call.1} parent=1 // pred_fallthru
      _
    // Predicated region
    $region38: #{tpu_custom_call.1} parent=1 // pred_check
      _
    $region39: #{tpu_custom_call.1} parent=1 // pred_check_branch
      %127 = sbr.rel (0) target = $region41
    $region40: #{tpu_custom_call.1} parent=1 // pred_region
      _
    $region41: #{tpu_custom_call.1} parent=1 // pred_fallthru
      _
    // Predicated region
    $region42: #{tpu_custom_call.1} parent=1 // pred_check
      _
    $region43: #{tpu_custom_call.1} parent=1 // pred_check_branch
      %129 = sbr.rel (0) target = $region45
    $region44: #{tpu_custom_call.1} parent=1 // pred_region
      _
    $region45: #{tpu_custom_call.1} parent=1 // pred_fallthru
      _
    // Predicated region
    $region46: #{tpu_custom_call.1} parent=1 // pred_check
      _
    $region47: #{tpu_custom_call.1} parent=1 // pred_check_branch
      %131 = sbr.rel (0) target = $region49
    $region48: #{tpu_custom_call.1} parent=1 // pred_region
      %132 = dma.done [#allocation5], 128
    $region49: #{tpu_custom_call.1} parent=1 // pred_fallthru
      _
    // Predicated region
    $region50: #{tpu_custom_call.1} parent=1 // pred_check
      _
    $region51: #{tpu_custom_call.1} parent=1 // pred_check_branch
      %134 = sbr.rel (0) target = $region53
    $region52: #{tpu_custom_call.1} parent=1 // pred_region
      _
    $region53: #{tpu_custom_call.1} parent=1 // pred_fallthru
      _
    // Predicated region
    $region54: #{tpu_custom_call.1} parent=1 // pred_check
      _
    $region55: #{tpu_custom_call.1} parent=1 // pred_check_branch
      %136 = sbr.rel (0) target = $region57
    $region56: #{tpu_custom_call.1} parent=1 // pred_region
      _
    $region57: #{tpu_custom_call.1} parent=1 // pred_fallthru
      _
    %137 = vsyncpa [#allocation5], 1
    %138 = vsyncpa [#allocation6], 1

</llo_original>
